<compile_context>
chip_gen: v5e
topology: v5e:2x2
jax: 0.10.0
libtpu: 0.0.40
codegen_flags: <defaults>
</compile_context>

<pallas_src>
import functools

import numpy as np
import jax
import jax.numpy as jnp
from jax.experimental import pallas as pl
from jax.experimental.pallas import tpu as pltpu


_TARGET_BLOCK_BYTES = 2 * 1024 * 1024  # ~2 MiB per x block (x+out double-buffered ~= 8 MiB)
_MAX_LANE_TILE = 2048                  # lanes per block (multiple of 128)


def _pick_tile(dim, multiple, max_tile):
    """Largest divisor of `dim` that is a multiple of `multiple` and <= max_tile.

    Falls back to the full dim (always a legal block extent) if no such divisor
    exists or if the dim already fits in the budget.
    """
    if dim <= max_tile:
        return dim
    for t in range(int(max_tile), 0, -1):
        if dim % t == 0 and t % multiple == 0:
            return t
    return dim


def _wscale_kernel(x_ref, b_ref, o_ref, *, scale):
    # Pure streaming elementwise op; bias block broadcasts over batch / lanes.
    # (bias already carries the lr_multiplier factor.)
    o_ref[...] = x_ref[...] * scale + b_ref[...]


def _wscale_2d(x2, b_row, *, scale):
    """y[i, f] = x2[i, f] * scale + b_row[f], tiled over rows and features."""
    B, F = x2.shape
    itemsize = x2.dtype.itemsize
    sub = 16 if itemsize == 2 else 8

    tf = _pick_tile(F, 128, 2 * _MAX_LANE_TILE)
    max_tb = max(1, _TARGET_BLOCK_BYTES // (tf * itemsize))
    tb = _pick_tile(B, sub, max_tb)
    grid = (B // tb, F // tf)

    cost = pl.CostEstimate(
        flops=2 * B * F,
        transcendentals=0,
        bytes_accessed=2 * B * F * itemsize + F * itemsize,
    )
    kern = functools.partial(_wscale_kernel, scale=scale)
    return pl.pallas_call(
        kern,
        out_shape=jax.ShapeDtypeStruct((B, F), x2.dtype),
        grid=grid,
        in_specs=[
            pl.BlockSpec((tb, tf), lambda i, j: (i, j)),
            pl.BlockSpec((1, tf), lambda i, j: (0, j)),
        ],
        out_specs=pl.BlockSpec((tb, tf), lambda i, j: (i, j)),
        compiler_params=pltpu.CompilerParams(
            dimension_semantics=("parallel", "parallel")
        ),
        cost_estimate=cost,
    )(x2, b_row.reshape(1, F))


def wscale_forward(x, bias, *, scale, lr_multiplier=1.0):
    """Pallas implementation of WScaleLayer.forward.

    x: (N, C, H, W) or (N, C); bias: (C,)
    """
    scale = float(scale)
    lr_multiplier = float(lr_multiplier)
    # Fold lr_multiplier into the bias once (in f32, then cast) -- bias is only
    # C elements, so this is free and removes a VPU multiply per grid step.
    b_scaled = (bias.astype(jnp.float32) * lr_multiplier).astype(x.dtype)

    if x.ndim == 4:
        N, C, H, W = x.shape
        HW = H * W
        itemsize = x.dtype.itemsize

        if HW < 128:
            # Spatial extent too small for lane-dense stores: flatten the
            # feature map to (N, C*HW) and pre-tile the bias so the last dim
            # can still be a 128-multiple (avoids masked vst.msk stores).
            x2 = x.reshape(N, C * HW)
            b_row = jnp.repeat(b_scaled, HW)
            out = _wscale_2d(x2, b_row, scale=scale)
            return out.reshape(N, C, H, W)

        x3 = x.reshape(N, C, HW)
        sub = 16 if itemsize == 2 else 8
        lt = _pick_tile(HW, 128, _MAX_LANE_TILE)
        max_ct = max(1, _TARGET_BLOCK_BYTES // (lt * itemsize))
        ct = _pick_tile(C, sub, max_ct)
        grid = (N, C // ct, HW // lt)

        cost = pl.CostEstimate(
            flops=2 * N * C * HW,
            transcendentals=0,
            bytes_accessed=2 * N * C * HW * itemsize + C * itemsize,
        )
        kern = functools.partial(_wscale_kernel, scale=scale)
        out3 = pl.pallas_call(
            kern,
            out_shape=jax.ShapeDtypeStruct((N, C, HW), x.dtype),
            grid=grid,
            in_specs=[
                pl.BlockSpec((1, ct, lt), lambda n, j, k: (n, j, k)),
                pl.BlockSpec((1, ct, 1), lambda n, j, k: (0, j, 0)),
            ],
            out_specs=pl.BlockSpec((1, ct, lt), lambda n, j, k: (n, j, k)),
            compiler_params=pltpu.CompilerParams(
                dimension_semantics=("parallel", "parallel", "parallel")
            ),
            cost_estimate=cost,
        )(x3, b_scaled.reshape(1, C, 1))
        return out3.reshape(N, C, H, W)

    if x.ndim == 2:
        return _wscale_2d(x, b_scaled, scale=scale)

    raise ValueError(
        "The input tensor should be with shape [batch_size, channel, height, "
        f"width], or [batch_size, channel]!\nBut {x.shape} is received!"
    )


if __name__ == "__main__":
    # Module hyperparameters (deterministic, in-script).
    in_channels = 4
    out_channels = 4
    kernel_size = 3
    gain = np.sqrt(2.0)
    lr_multiplier = 1.0
    fan_in = in_channels * kernel_size * kernel_size
    scale = gain / np.sqrt(fan_in) * lr_multiplier

    key = jax.random.PRNGKey(0)
    kx, kx2, kx3, kb = jax.random.split(key, 4)

    # nn.Parameter(torch.zeros(out_channels)) is zero-init; use a deterministic
    # non-zero bias here to exercise the broadcast path.
    bias = jax.random.normal(kb, (out_channels,), dtype=jnp.float32) * 0.1

    # 4D (NCHW) input, spatial >= 128 lanes after flattening.
    x4 = jax.random.normal(kx, (2, out_channels, 16, 16), dtype=jnp.float32)
    y4 = wscale_forward(x4, bias, scale=scale, lr_multiplier=lr_multiplier)
    y4 = jax.block_until_ready(y4)
    ref4 = x4 * scale + bias.reshape(1, -1, 1, 1) * lr_multiplier
    np.testing.assert_allclose(np.asarray(y4), np.asarray(ref4), rtol=1e-6, atol=1e-6)

    # 4D input with tiny spatial extent (HW < 128 -> flattened lane-dense path).
    x4s = jax.random.normal(kx3, (2, out_channels, 8, 8), dtype=jnp.float32)
    y4s = wscale_forward(x4s, bias, scale=scale, lr_multiplier=lr_multiplier)
    y4s = jax.block_until_ready(y4s)
    ref4s = x4s * scale + bias.reshape(1, -1, 1, 1) * lr_multiplier
    np.testing.assert_allclose(np.asarray(y4s), np.asarray(ref4s), rtol=1e-6, atol=1e-6)

    # 2D (NC) input.
    x2 = jax.random.normal(kx2, (2, out_channels), dtype=jnp.float32)
    y2 = wscale_forward(x2, bias, scale=scale, lr_multiplier=lr_multiplier)
    y2 = jax.block_until_ready(y2)
    ref2 = x2 * scale + bias.reshape(1, -1) * lr_multiplier
    np.testing.assert_allclose(np.asarray(y2), np.asarray(ref2), rtol=1e-6, atol=1e-6)

    print("KERNEL_OK")
</pallas_src>

<mosaic_0001>
module attributes {stable_mosaic.version = 11 : i64} {
  func.func @_wscale_kernel(%arg0: i32, %arg1: i32, %arg2: i32, %arg3: memref<1x4x256xf32, #tpu.memory_space<vmem>>, %arg4: memref<1x4x1xf32, #tpu.memory_space<vmem>>, %arg5: memref<1x4x256xf32, #tpu.memory_space<vmem>>) attributes {dimension_semantics = [#tpu.dimension_semantics<parallel>, #tpu.dimension_semantics<parallel>, #tpu.dimension_semantics<parallel>], iteration_bounds = array<i64: 2, 1, 1>, scalar_prefetch = 0 : i64, scratch_operands = 0 : i64, tpu.core_type = #tpu.core_type<tc>, window_params = [{transform_indices = @transform_0, window_bounds = array<i64: 1, 4, 256>}, {transform_indices = @transform_1, window_bounds = array<i64: 1, 4, 1>}, {transform_indices = @transform_2, window_bounds = array<i64: 1, 4, 256>}]} {
    %c0 = arith.constant 0 : index
    %c0_0 = arith.constant 0 : index
    %c0_1 = arith.constant 0 : index
    %0 = vector.load %arg3[%c0, %c0_0, %c0_1] : memref<1x4x256xf32, #tpu.memory_space<vmem>>, vector<1x4x256xf32>
    %cst = arith.constant 0.235702261 : f32
    %1 = vector.broadcast %cst : f32 to vector<1x4x256xf32>
    %2 = arith.mulf %0, %1 : vector<1x4x256xf32>
    %c0_2 = arith.constant 0 : index
    %c0_3 = arith.constant 0 : index
    %c0_4 = arith.constant 0 : index
    %3 = vector.load %arg4[%c0_2, %c0_3, %c0_4] : memref<1x4x1xf32, #tpu.memory_space<vmem>>, vector<1x4x1xf32>
    %4 = vector.broadcast %3 : vector<1x4x1xf32> to vector<1x4x256xf32>
    %5 = arith.addf %2, %4 : vector<1x4x256xf32>
    %c0_5 = arith.constant 0 : index
    %c0_6 = arith.constant 0 : index
    %c0_7 = arith.constant 0 : index
    %6 = vector.load %arg5[%c0_5, %c0_6, %c0_7] : memref<1x4x256xf32, #tpu.memory_space<vmem>>, vector<1x4x256xf32>
    tpu.vector_store %arg5[%c0_5, %c0_6, %c0_7], %5 {strides = array<i32>} : memref<1x4x256xf32, #tpu.memory_space<vmem>>, vector<1x4x256xf32>,
    return
  }
  func.func @transform_0(%arg0: i32, %arg1: i32, %arg2: i32) -> (i32, i32, i32) {
    %c0_i32 = arith.constant 0 : i32
    return %arg0, %arg1, %arg2 : i32, i32, i32
  }
  func.func @transform_1(%arg0: i32, %arg1: i32, %arg2: i32) -> (i32, i32, i32) {
    %c0_i32 = arith.constant 0 : i32
    %c0_i32_0 = arith.constant 0 : i32
    %c0_i32_1 = arith.constant 0 : i32
    return %c0_i32, %arg1, %c0_i32_0 : i32, i32, i32
  }
  func.func @transform_2(%arg0: i32, %arg1: i32, %arg2: i32) -> (i32, i32, i32) {
    %c0_i32 = arith.constant 0 : i32
    return %arg0, %arg1, %arg2 : i32, i32, i32
  }
}

</mosaic_0001>

<llo_original>
// kernel: tpu_custom_call.1
$region0: #{tpu_custom_call.1}
  #allocation0 [shape = 'u32[]', space=smem, size = 0x4, offset = 0x4, fixed_abs, tag = 'smem constant byte address 0x4 - core index']
  #allocation1 [shape = 'u32[72,128]{1,0:T(1,128)}', space=vmem, size = 0x9000, scoped, tag = 'internal scratch']
  %s0 = inlined_call_operand.hbm [shape: f32[2,4,256], index: 0, kind: input, shape index: {}]
  %s1 = inlined_call_operand.vmem [shape: f32[1,4,1], index: 1, kind: input, shape index: {}]
  %s2 = inlined_call_operand.hbm [shape: f32[2,4,256], index: 2, kind: output, shape index: {}]
  %s3 = sld [smem:[#allocation0]]
  $region45: #{tpu_custom_call.1} parent=0
    _
  %s5 = ssub.s32 1, %s3
  %s6 = scalar_select 0, %s5, %s3
  $region1: #{tpu_custom_call.1} parent=0
    #allocation2 [shape = 'u8[8192]{0}', space=vmem, size = 0x2000, scoped, tag = 'input window, operand 0']
    #allocation3 [shape = 's32[2]{0}', space=sflag, size = 0x8, scoped, tag = 'scoped memory for tpu_custom_call.1']
    #allocation4 [shape = 's32[2]{0}', space=sflag, size = 0x8, scoped, tag = 'scoped memory for tpu_custom_call.1']
    #allocation5 [shape = 'u8[8192]{0}', space=vmem, size = 0x2000, scoped, tag = 'output window, operand 0']
    %7 = vsyncpa [#allocation3], 0
    %s8 = scalar_lea.sflag [#allocation3], 1
    %9 = vsyncpa %s8, 0
    %10 = vsyncpa [#allocation4], 0
    %s11 = scalar_lea.sflag [#allocation4], 1
    %12 = vsyncpa %s11, 0
    loop: start=0, step=1, limit=4
    $region2: #{tpu_custom_call.1} parent=1 // loop_pre_header
      _
    $region3: #{tpu_custom_call.1} parent=1 // loop_header
      %s14 = sphi 0, %s18
      %p15 = scmp.ge.s32.totalorder %s14, 4
      %s21 = sphi 0, %s40
      %s22 = sphi 0, %s36
      %s23 = sphi 0, %s32
      %s24 = sphi 0, %s21
      %s25 = sphi 0, %s22
      %s26 = sphi 0, %s23
      %s27 = sphi 0, %s24
      %s28 = sphi 0, %s25
      %s29 = sphi 0, %s26
      %s47 = sphi 0, %s49
      %s50 = sphi 0, %s47
      %s51 = sphi 0, %s50
      %s67 = sphi 0, %s51
      %s73 = sphi 0, %s75
      %s76 = sphi 0, %s73
      %s77 = sphi 0, %s76
      %s93 = sphi 0, %s77
      %s103 = sphi 0, %s105
      %s106 = sphi 0, %s103
      %s107 = sphi 0, %s106
      %s123 = sphi 0, %s107
    $region4: #{tpu_custom_call.1} parent=1 // loop_header_branch
      %17 = sbr.rel (%p15) target = $region8
    $region5: #{tpu_custom_call.1} parent=1 // loop_body
      %s19 = ssub.s32 %s14, 1
      %s20 = ssub.s32 %s14, 2
      %s30 = sadd.s32 1, %s23
      %p31 = scmp.ge.s32.totalorder %s30, 1
      %s32 = scalar_select %p31, 0, %s30
      %s33 = sadd.s32 1, %s22
      %s34 = scalar_select %p31, %s33, %s22
      %p35 = scmp.ge.s32.totalorder %s34, 1
      %s36 = scalar_select %p35, 0, %s34
      %s37 = sadd.s32 1, %s21
      %s38 = scalar_select %p35, %s37, %s21
      %p39 = scmp.ge.s32.totalorder %s38, 2
      %s40 = scalar_select %p39, 0, %s38
      %s41 = ssub.s32 %s21, %s40
      %s42 = ssub.s32 %s22, %s36
      %s43 = sor.u32 %s41, %s42
      %s44 = ssub.s32 %s23, %s32
      %s45 = sor.u32 %s43, %s44
      %p46 = scmp.eq.s32.totalorder %s45, 0
      %s48 = sadd.s32 %s47, 1
      %s49 = scalar_select %p46, %s47, %s48
      %p52 = pneg %p46
      %p53 = scmp.eq.s32.totalorder %s14, 1
      %p54 = por %p52, %p53
      %p55 = scmp.ne.s32.totalorder %s47, %s50
      %p56 = scmp.eq.s32.totalorder %s14, 0
      %p57 = por %p55, %p56
      %p58 = scmp.ne.s32.totalorder %s47, %s50
      %p59 = scmp.eq.s32.totalorder %s19, 1
      %p60 = por %p58, %p59
      %p61 = scmp.ne.s32.totalorder %s50, %s51
      %p62 = scmp.eq.s32.totalorder %s19, 0
      %p63 = por %p61, %p62
      %p64 = scmp.ne.s32.totalorder %s50, %s51
      %p65 = scmp.eq.s32.totalorder %s20, 1
      %p66 = por %p64, %p65
      %p68 = scmp.ne.s32.totalorder %s51, %s67
      %p69 = scmp.eq.s32.totalorder %s20, 0
      %p70 = por %p68, %p69
      %s71 = ssub.s32 %s22, %s36
      %p72 = scmp.eq.s32.totalorder %s71, 0
      %s74 = sadd.s32 %s73, 1
      %s75 = scalar_select %p72, %s73, %s74
      %p78 = pneg %p72
      %p79 = scmp.eq.s32.totalorder %s14, 1
      %p80 = por %p78, %p79
      %p81 = scmp.ne.s32.totalorder %s73, %s76
      %p82 = scmp.eq.s32.totalorder %s14, 0
      %p83 = por %p81, %p82
      %p84 = scmp.ne.s32.totalorder %s73, %s76
      %p85 = scmp.eq.s32.totalorder %s19, 1
      %p86 = por %p84, %p85
      %p87 = scmp.ne.s32.totalorder %s76, %s77
      %p88 = scmp.eq.s32.totalorder %s19, 0
      %p89 = por %p87, %p88
      %p90 = scmp.ne.s32.totalorder %s76, %s77
      %p91 = scmp.eq.s32.totalorder %s20, 1
      %p92 = por %p90, %p91
      %p94 = scmp.ne.s32.totalorder %s77, %s93
      %p95 = scmp.eq.s32.totalorder %s20, 0
      %p96 = por %p94, %p95
      %s97 = ssub.s32 %s21, %s40
      %s98 = ssub.s32 %s22, %s36
      %s99 = sor.u32 %s97, %s98
      %s100 = ssub.s32 %s23, %s32
      %s101 = sor.u32 %s99, %s100
      %p102 = scmp.eq.s32.totalorder %s101, 0
      %s104 = sadd.s32 %s103, 1
      %s105 = scalar_select %p102, %s103, %s104
      %p108 = pneg %p102
      %p109 = scmp.eq.s32.totalorder %s14, 1
      %p110 = por %p108, %p109
      %p111 = scmp.ne.s32.totalorder %s103, %s106
      %p112 = scmp.eq.s32.totalorder %s14, 0
      %p113 = por %p111, %p112
      %p114 = scmp.ne.s32.totalorder %s103, %s106
      %p115 = scmp.eq.s32.totalorder %s19, 1
      %p116 = por %p114, %p115
      %p117 = scmp.ne.s32.totalorder %s106, %s107
      %p118 = scmp.eq.s32.totalorder %s19, 0
      %p119 = por %p117, %p118
      %p120 = scmp.ne.s32.totalorder %s106, %s107
      %p121 = scmp.eq.s32.totalorder %s20, 1
      %p122 = por %p120, %p121
      %p124 = scmp.ne.s32.totalorder %s107, %s123
      %p125 = scmp.eq.s32.totalorder %s20, 0
      %p126 = por %p124, %p125
      %p127 = scmp.le.s32.totalorder 1, %s14
      %p128 = scmp.lt.s32.totalorder %s14, 3
      %p129 = pnand %p127, %p128
      %p130 = pneg %p129
      // Predicated region
      $region9: #{tpu_custom_call.1} parent=5 // pred_check
        _
      $region10: #{tpu_custom_call.1} parent=5 // pred_check_branch
        %132 = sbr.rel (%p129) target = $region12
      $region11: #{tpu_custom_call.1} parent=5 // pred_region
        %s133 = ssub.s32 %s14, 1
        // Predicated region
        $region13: #{tpu_custom_call.1} parent=11 // pred_check
          %p134 = pneg %p89
        $region14: #{tpu_custom_call.1} parent=11 // pred_check_branch
          %136 = sbr.rel (%p134) target = $region16
        $region15: #{tpu_custom_call.1} parent=11 // pred_region
          %p137 = scmp.lt.s32.totalorder %s25, 0
          %s138 = scalar_select %p137, %s25, 0
          %s139 = smul.addr %s138, 4
          %s140 = scalar_lea.vmem %s1, %s139
        $region16: #{tpu_custom_call.1} parent=11 // pred_fallthru
          _
      $region12: #{tpu_custom_call.1} parent=5 // pred_fallthru
        _
      %p141 = scmp.lt.s32.totalorder %s14, 2
      // Predicated region
      $region17: #{tpu_custom_call.1} parent=5 // pred_check
        %p142 = pneg %p141
      $region18: #{tpu_custom_call.1} parent=5 // pred_check_branch
        %144 = sbr.rel (%p142) target = $region20
      $region19: #{tpu_custom_call.1} parent=5 // pred_region
        // Predicated region
        $region21: #{tpu_custom_call.1} parent=19 // pred_check
          %p145 = pneg %p57
        $region22: #{tpu_custom_call.1} parent=19 // pred_check_branch
          %147 = sbr.rel (%p145) target = $region24
        $region23: #{tpu_custom_call.1} parent=19 // pred_region
          %s148 = sand.u32 %s47, 1
          %s149 = scalar_lea.sflag [#allocation3], %s148
          %s150 = sand.u32 %s47, 1
          %s151 = smul.addr %s150, 8
          %s152 = scalar_lea.vmem [#allocation2], %s151
          %s153 = smul.u32 2, %s23
          %155 = vsyncadd %s149, 0
          %s156 = smul.addr %s22, 2
          %s157 = sadd.s32 %s153, %s156
          %s158 = smul.addr %s21, 2
          %s159 = sadd.s32 %s157, %s158
          %s160 = smul.addr %s159, 4
          %s161 = scalar_lea.hbm %s0, %s160
          %s163 = sshll.u32 %s161, 4
          %s164 = int_to_ptr.hbm [resolvable:$true] %s163
          %s165 = sshll.u32 %s152, 4
          %s166 = int_to_ptr.vmem [resolvable:$true] %s165
          %168 = dma.hbm_to_vmem [thread:$0]  %s164, 128, %s166, %s149
        $region24: #{tpu_custom_call.1} parent=19 // pred_fallthru
          _
      $region20: #{tpu_custom_call.1} parent=5 // pred_fallthru
        _
      %p169 = scmp.le.s32.totalorder 1, %s14
      %p170 = scmp.lt.s32.totalorder %s14, 3
      %p171 = pnand %p169, %p170
      %p172 = pneg %p171
      // Predicated region
      $region25: #{tpu_custom_call.1} parent=5 // pred_check
        _
      $region26: #{tpu_custom_call.1} parent=5 // pred_check_branch
        %174 = sbr.rel (%p171) target = $region28
      $region27: #{tpu_custom_call.1} parent=5 // pred_region
        %s175 = ssub.s32 %s14, 1
        %s176 = sand.u32 %s50, 1
        %s177 = scalar_lea.sflag [#allocation3], %s176
        %s178 = sand.u32 %s50, 1
        %s179 = smul.addr %s178, 8
        %s180 = scalar_lea.vmem [#allocation2], %s179
        // Predicated region
        $region29: #{tpu_custom_call.1} parent=27 // pred_check
          %p181 = pneg %p63
        $region30: #{tpu_custom_call.1} parent=27 // pred_check_branch
          %183 = sbr.rel (%p181) target = $region32
        $region31: #{tpu_custom_call.1} parent=27 // pred_region
          %185 = dma.done %s177, 128
        $region32: #{tpu_custom_call.1} parent=27 // pred_fallthru
          _
        %s186 = sand.u32 %s50, 1
        %s187 = scalar_lea.sflag [#allocation3], %s186
        %s188 = sand.u32 %s50, 1
        %s189 = smul.addr %s188, 8
        %s190 = scalar_lea.vmem [#allocation2], %s189
        %p191 = pneg %p63
        %p192 = pneg %p60
        %p193 = scmp.lt.s32.totalorder %s25, 0
        %s194 = scalar_select %p193, %s25, 0
        %s195 = smul.addr %s194, 4
        %s196 = scalar_lea.vmem %s1, %s195
        %p197 = pneg %p89
        %p198 = pneg %p86
        %p199 = pneg %p119
        %p200 = pneg %p116
        %s201 = sand.u32 %s106, 1
        %s202 = scalar_lea.sflag [#allocation4], %s201
        %s203 = sand.u32 %s106, 1
        %s204 = smul.addr %s203, 8
        %s205 = scalar_lea.vmem [#allocation5], %s204
        %s206 = smul.u32 2, %s26
        %p207 = scmp.lt.s32.totalorder %s25, 0
        %s208 = scalar_select %p207, %s25, 0
        %s209 = smul.addr %s208, 4
        %s210 = scalar_lea.vmem %s1, %s209
        %s211 = smul.u32 2, %s26
        %v212 = vld [vmem:[%s180] sm:$0xff]
        %v213 = vmul.f32 %v212, 0.23570226
        %v214 = vld [vmem:[%s210] sm:$0xf]
        %216 = vset.pattern.permute.xlu0 0
        %217 = vperm.xlu0 %216, %v214
        %v218 = vpop.permute.xlu0 %217
        %v220 = vunpack.c.l.s4 839922192
        %v221 = vunpack.c.0.s8 %v220
        %v222 = vperm.slane %v218, %v221
        %v224 = vadd.f32 %v213, %v222
        %225 = vst [vmem:[%s205] sm:$0xff] %v224
        %s226 = sand.u32 %s106, 1
        %s227 = scalar_lea.sflag [#allocation4], %s226
        %s228 = sand.u32 %s106, 1
        %s229 = smul.addr %s228, 8
        %s230 = scalar_lea.vmem [#allocation5], %s229
        // Predicated region
        $region33: #{tpu_custom_call.1} parent=27 // pred_check
          %p231 = pneg %p116
        $region34: #{tpu_custom_call.1} parent=27 // pred_check_branch
          %233 = sbr.rel (%p231) target = $region36
        $region35: #{tpu_custom_call.1} parent=27 // pred_region
          %s234 = smul.u32 2, %s26
          %236 = vsyncadd %s227, 0
          %s237 = smul.addr %s25, 2
          %s238 = sadd.s32 %s234, %s237
          %s239 = smul.addr %s24, 2
          %s240 = sadd.s32 %s238, %s239
          %s241 = smul.addr %s240, 4
          %s242 = scalar_lea.hbm %s2, %s241
          %s244 = sshll.u32 %s230, 4
          %s245 = int_to_ptr.vmem [resolvable:$true] %s244
          %s246 = sshll.u32 %s242, 4
          %s247 = int_to_ptr.hbm [resolvable:$true] %s246
          %249 = dma.vmem_to_hbm [thread:$0]  %s245, 128, %s247, %s227
        $region36: #{tpu_custom_call.1} parent=27 // pred_fallthru
          _
      $region28: #{tpu_custom_call.1} parent=5 // pred_fallthru
        _
      %p250 = scmp.le.s32.totalorder 2, %s14
      // Predicated region
      $region37: #{tpu_custom_call.1} parent=5 // pred_check
        %p251 = pneg %p250
      $region38: #{tpu_custom_call.1} parent=5 // pred_check_branch
        %253 = sbr.rel (%p251) target = $region40
      $region39: #{tpu_custom_call.1} parent=5 // pred_region
        %s254 = ssub.s32 %s14, 2
        // Predicated region
        $region41: #{tpu_custom_call.1} parent=39 // pred_check
          %p255 = pneg %p122
        $region42: #{tpu_custom_call.1} parent=39 // pred_check_branch
          %257 = sbr.rel (%p255) target = $region44
        $region43: #{tpu_custom_call.1} parent=39 // pred_region
          %s258 = sand.u32 %s107, 1
          %s259 = scalar_lea.sflag [#allocation4], %s258
          %s260 = sand.u32 %s107, 1
          %s261 = smul.addr %s260, 8
          %s262 = scalar_lea.vmem [#allocation5], %s261
          %264 = dma.done %s259, 128
        $region44: #{tpu_custom_call.1} parent=39 // pred_fallthru
          _
      $region40: #{tpu_custom_call.1} parent=5 // pred_fallthru
        _
    $region6: #{tpu_custom_call.1} parent=1 // loop_footer
      %s18 = sadd.s32 1, %s14
    $region7: #{tpu_custom_call.1} parent=1 // loop_footer_branch
      %13 = sbr.rel target = $region3
    $region8: #{tpu_custom_call.1} parent=1 // loop_exit
      _
    %265 = vsyncpa [#allocation3], 1
    %s266 = scalar_lea.sflag [#allocation3], 1
    %267 = vsyncpa %s266, 1
    %268 = vsyncpa [#allocation4], 1
    %s269 = scalar_lea.sflag [#allocation4], 1
    %270 = vsyncpa %s269, 1

</llo_original>
